<compile_context>
chip_gen: v7x
topology: tpu7x:2x2x1
jax: 0.10.0
libtpu: 0.0.40
codegen_flags: <defaults>
</compile_context>

<pallas_src>
import functools
import math

import jax
import jax.numpy as jnp
from jax import lax
from jax.experimental import pallas as pl
from jax.experimental.pallas import tpu as pltpu

EPS = 1e-5  # RMSNorm eps


def _rmsnorm(x, w):
    ms = jnp.mean(x * x, axis=-1, keepdims=True)
    return (x * lax.rsqrt(ms + EPS)) * w


# --------------------------------------------------------------------------
# Pass 1: RMSNorm + fused QKV projection + RoPE  (computed once per token)
# --------------------------------------------------------------------------
def qkv_rope_kernel(x_ref, n1_ref, wqkv_ref, cos_ref, sin_ref,
                    q_ref, k_ref, v_ref, *, num_heads):
    E = x_ref.shape[2]
    Dh = E // num_heads
    half = Dh // 2

    xn = _rmsnorm(x_ref[0], n1_ref[...]).astype(jnp.bfloat16)             # (TS, E)
    qkv = jnp.dot(xn, wqkv_ref[...],
                  preferred_element_type=jnp.float32)                     # (TS, 3E) f32

    cos = cos_ref[...]      # (TS, E)  (per-head tiled)
    sin = sin_ref[...]      # (TS, E)  sign-folded sin

    def rope_slab(t):       # t: (TS, E) -- rotate-half within each head's Dh lanes
        if half % 128 == 0:
            rot = jnp.concatenate(
                [pltpu.roll(t[:, h * Dh:(h + 1) * Dh], shift=half, axis=-1)
                 for h in range(num_heads)], axis=-1)
        else:
            parts = []
            for h in range(num_heads):
                parts.append(t[:, h * Dh + half:(h + 1) * Dh])
                parts.append(t[:, h * Dh:h * Dh + half])
            rot = jnp.concatenate(parts, axis=-1)
        return t * cos + rot * sin

    q_ref[0] = rope_slab(qkv[:, :E]).astype(jnp.bfloat16)        # scale already in wq
    k_ref[0] = rope_slab(qkv[:, E:2 * E]).astype(jnp.bfloat16)
    v_ref[0] = qkv[:, 2 * E:].astype(jnp.bfloat16)


# --------------------------------------------------------------------------
# Pass 2: flash-style causal attention + wo + residual + RMSNorm + SwiGLU FFN
# --------------------------------------------------------------------------
def attn_ffn_kernel(x_ref, q_ref, k_ref, v_ref,
                    wo_ref, n2_ref, w12_ref, w3_ref,
                    o_ref, ctx_ref, *, num_heads, q_tile, k_tile):
    E = k_ref.shape[2]
    Dh = E // num_heads
    Hf = w3_ref.shape[0]

    qi = pl.program_id(1)
    q0 = pl.multiple_of(qi * q_tile, q_tile)

    x_q = x_ref[0]                                   # (TQ, E) f32 residual
    q = q_ref[0]                                     # (TQ, E) bf16, roped + pre-scaled

    # Causal block skipping: only key blocks with k0 < q0 + TQ contribute.
    n_kb = (q0 + q_tile) // k_tile
    row = q0 + lax.broadcasted_iota(jnp.int32, (q_tile, k_tile), 0)
    col_base = lax.broadcasted_iota(jnp.int32, (q_tile, k_tile), 1)

    # TODO(synk): for large head counts use a head grid axis / fori_loop; the
    #             static unroll is fine for small H and keeps slices 128-aligned
    #             when Dh is a multiple of 128.
    for h in range(num_heads):
        sl = slice(h * Dh, (h + 1) * Dh)
        qh = q[:, sl]                                # (TQ, Dh) bf16

        def body(kb, carry):
            m, l, acc = carry
            k0 = pl.multiple_of(kb * k_tile, k_tile)
            kh = k_ref[0, pl.ds(k0, k_tile), sl]     # (TK, Dh) bf16
            vh = v_ref[0, pl.ds(k0, k_tile), sl]     # (TK, Dh) bf16
            s = lax.dot_general(qh, kh, (((1,), (1,)), ((), ())),
                                preferred_element_type=jnp.float32)   # (TQ, TK)
            s = jnp.where(col_base + k0 > row, -1e30, s)
            m_new = jnp.maximum(m, jnp.max(s, axis=-1, keepdims=True))
            alpha = jnp.exp(m - m_new)
            p = jnp.exp(s - m_new)
            l_new = alpha * l + jnp.sum(p, axis=-1, keepdims=True)
            acc_new = alpha * acc + jnp.dot(p.astype(jnp.bfloat16), vh,
                                            preferred_element_type=jnp.float32)
            return m_new, l_new, acc_new

        m0 = jnp.full((q_tile, 1), -1e30, jnp.float32)
        l0 = jnp.zeros((q_tile, 1), jnp.float32)
        a0 = jnp.zeros((q_tile, Dh), jnp.float32)
        m, l, acc = lax.fori_loop(0, n_kb, body, (m0, l0, a0))
        # lane-dense scratch; 128-aligned when Dh % 128 == 0 (production shapes)
        ctx_ref[:, sl] = acc * pl.reciprocal(l, approx=True)

    att = jnp.dot(ctx_ref[...].astype(jnp.bfloat16), wo_ref[...],
                  preferred_element_type=jnp.float32)             # (TQ, E)
    x1 = x_q + att

    # ------------------- feedforward branch (SwiGLU) -------------------
    xn2 = _rmsnorm(x1, n2_ref[...]).astype(jnp.bfloat16)
    h12 = jnp.dot(xn2, w12_ref[...],
                  preferred_element_type=jnp.float32)             # (TQ, 2H) fused w1|w2
    h1 = h12[:, :Hf]
    h2 = h12[:, Hf:]
    # numerically stable SiLU: x * sigmoid(x) = x * 0.5 * (1 + tanh(x/2))  (EUP tanh)
    gate = h1 * (0.5 * (1.0 + jnp.tanh(0.5 * h1)))
    hidden = (gate * h2).astype(jnp.bfloat16)
    ff = jnp.dot(hidden, w3_ref[...], preferred_element_type=jnp.float32)

    o_ref[0] = (x1 + ff).astype(o_ref.dtype)


# --------------------------------------------------------------------------
# Wrapper
# --------------------------------------------------------------------------
def _vmem_limit_bytes():
    # ~48 MiB on v7x (64 MiB physical), ~96 MiB on v5e/v6e (128 MiB physical).
    try:
        cap = int(pltpu.get_tpu_info().vmem_capacity_bytes)
    except Exception:
        cap = 64 * 1024 * 1024
    return int(min((cap * 3) // 4, 112 * 1024 * 1024))


def _pick_q_tile(S):
    if S <= 128:
        return S
    kind = jax.devices()[0].device_kind.lower()
    tq = 128 if "v5" in kind else 256        # 128x128 MXU on v5e, 2x256x256 on v6e/v7x
    while tq > 8 and S % tq:
        tq //= 2
    return tq if S % tq == 0 else S          # TODO(synk): pad ragged S instead


def transformer_block(x, params, cos, sin, *, num_heads):
    B, S, E = x.shape
    Hf = params["w1"].shape[1]
    Dh = E // num_heads
    half = Dh // 2
    scale = 1.0 / math.sqrt(Dh)

    TQ = _pick_q_tile(S)
    assert S % TQ == 0
    NQ = S // TQ
    TK = TQ

    bf16 = jnp.bfloat16
    # fold 1/sqrt(Dh) into wq; fuse q|k|v and w1|w2
    wqkv = jnp.concatenate([params["wq"] * scale, params["wk"], params["wv"]],
                           axis=1).astype(bf16)                    # (E, 3E)
    wo = params["wo"].astype(bf16)
    w12 = jnp.concatenate([params["w1"], params["w2"]], axis=1).astype(bf16)  # (E, 2H)
    w3 = params["w3"].astype(bf16)
    # fold the rotate-half sign into the sin table (first half of each head negated)
    sin_signed = jnp.concatenate([-sin[:, :half], sin[:, half:]], axis=1)
    cos_full = jnp.tile(cos, (1, num_heads))          # (S, E)
    sin_full = jnp.tile(sin_signed, (1, num_heads))   # (S, E)

    vmem_limit = _vmem_limit_bytes()

    def const(shape):
        # constant across the whole grid -> single-buffered (halves its VMEM cost)
        nd = len(shape)
        return pl.BlockSpec(shape, lambda b, i, _nd=nd: (0,) * _nd,
                            pipeline_mode=pl.Buffered(1))

    # ---------------- pass 1: Q/K/V projection + RoPE (once per token) -----------
    qkv_fn = functools.partial(qkv_rope_kernel, num_heads=num_heads)
    q_r, k_r, v_r = pl.pallas_call(
        qkv_fn,
        out_shape=(jax.ShapeDtypeStruct((B, S, E), bf16),
                   jax.ShapeDtypeStruct((B, S, E), bf16),
                   jax.ShapeDtypeStruct((B, S, E), bf16)),
        grid_spec=pltpu.PrefetchScalarGridSpec(
            num_scalar_prefetch=0,
            grid=(B, NQ),
            in_specs=[
                pl.BlockSpec((1, TQ, E), lambda b, i: (b, i, 0)),   # x tile
                const((1, E)),                                      # norm1
                const((E, 3 * E)),                                  # fused wqkv
                pl.BlockSpec((TQ, E), lambda b, i: (i, 0)),         # cos (per-head tiled)
                pl.BlockSpec((TQ, E), lambda b, i: (i, 0)),         # signed sin
            ],
            out_specs=(pl.BlockSpec((1, TQ, E), lambda b, i: (b, i, 0)),
                       pl.BlockSpec((1, TQ, E), lambda b, i: (b, i, 0)),
                       pl.BlockSpec((1, TQ, E), lambda b, i: (b, i, 0))),
        ),
        compiler_params=pltpu.CompilerParams(
            dimension_semantics=("parallel", "parallel"),
            vmem_limit_bytes=vmem_limit),
    )(x, params["norm1"], wqkv, cos_full, sin_full)

    # ---------------- pass 2: flash attention + wo + FFN + residuals -------------
    attn_fn = functools.partial(attn_ffn_kernel, num_heads=num_heads,
                                q_tile=TQ, k_tile=TK)
    out = pl.pallas_call(
        attn_fn,
        out_shape=jax.ShapeDtypeStruct((B, S, E), x.dtype),
        grid_spec=pltpu.PrefetchScalarGridSpec(
            num_scalar_prefetch=0,
            grid=(B, NQ),
            in_specs=[
                pl.BlockSpec((1, TQ, E), lambda b, i: (b, i, 0)),   # x tile (residual)
                pl.BlockSpec((1, TQ, E), lambda b, i: (b, i, 0)),   # q tile (bf16)
                pl.BlockSpec((1, S, E), lambda b, i: (b, 0, 0)),    # K (DMA'd once per b)
                pl.BlockSpec((1, S, E), lambda b, i: (b, 0, 0)),    # V (DMA'd once per b)
                const((E, E)),                                      # wo
                const((1, E)),                                      # norm2
                const((E, 2 * Hf)),                                 # fused w1|w2
                const((Hf, E)),                                     # w3
            ],
            out_specs=pl.BlockSpec((1, TQ, E), lambda b, i: (b, i, 0)),
            scratch_shapes=[pltpu.VMEM((TQ, E), jnp.float32)],      # per-head ctx
        ),
        compiler_params=pltpu.CompilerParams(
            dimension_semantics=("parallel", "parallel"),
            vmem_limit_bytes=vmem_limit),
    )(x, q_r, k_r, v_r, wo, params["norm2"], w12, w3)
    return out


# ----------------------- plain-JAX f32 reference -----------------------
def reference(x, params, cos, sin, *, num_heads):
    def rmsnorm(t, w):
        ms = jnp.mean(t * t, axis=-1, keepdims=True)
        return t * lax.rsqrt(ms + EPS) * w

    B, S, E = x.shape
    Dh = E // num_heads
    xn = rmsnorm(x, params["norm1"][0])
    q = xn @ params["wq"]
    k = xn @ params["wk"]
    v = xn @ params["wv"]

    def split(t):
        return t.reshape(B, S, num_heads, Dh).transpose(0, 2, 1, 3)

    q, k, v = split(q), split(k), split(v)

    def rope(t):
        half = Dh // 2
        t1, t2 = t[..., :half], t[..., half:]
        rot = jnp.concatenate([-t2, t1], axis=-1)
        return t * cos[None, None] + rot * sin[None, None]

    q, k = rope(q), rope(k)
    s = jnp.einsum("bhqd,bhkd->bhqk", q, k)
    mask = jnp.triu(jnp.ones((S, S), bool), k=1)
    s = jnp.where(mask[None, None], -jnp.inf, s) / math.sqrt(Dh)
    p = jax.nn.softmax(s, axis=-1)
    ctx = jnp.einsum("bhqk,bhkd->bhqd", p, v).transpose(0, 2, 1, 3).reshape(B, S, E)
    x1 = x + ctx @ params["wo"]
    xn2 = rmsnorm(x1, params["norm2"][0])
    h1 = xn2 @ params["w1"]
    h2 = xn2 @ params["w2"]
    ff = (jax.nn.silu(h1) * h2) @ params["w3"]
    return x1 + ff


def precompute_rope(head_dim, context_length, theta=10000.0):
    inv_freq = 1.0 / (theta ** (jnp.arange(0, head_dim, 2, dtype=jnp.float32) / head_dim))
    positions = jnp.arange(context_length, dtype=jnp.float32)
    angles = positions[:, None] * inv_freq[None, :]          # (S, Dh//2)
    angles = jnp.concatenate([angles, angles], axis=1)       # (S, Dh)
    return jnp.cos(angles), jnp.sin(angles)


if __name__ == "__main__":
    # Small LLAMA2-style config (production sizes would use E, Dh, H multiples of 128).
    cfg = dict(emb_dim=32, n_heads=4, context_length=8, hidden_dim=64, dtype=jnp.float32)
    B, S, E, H = 2, cfg["context_length"], cfg["emb_dim"], cfg["hidden_dim"]
    Dh = E // cfg["n_heads"]

    key = jax.random.PRNGKey(0)
    keys = jax.random.split(key, 8)
    scale = 0.02
    params = {
        "norm1": jnp.ones((1, E), jnp.float32),
        "norm2": jnp.ones((1, E), jnp.float32),
        # weights stored as (in_features, out_features) so kernel does y = x @ W
        "wq": scale * jax.random.normal(keys[0], (E, E), jnp.float32),
        "wk": scale * jax.random.normal(keys[1], (E, E), jnp.float32),
        "wv": scale * jax.random.normal(keys[2], (E, E), jnp.float32),
        "wo": scale * jax.random.normal(keys[3], (E, E), jnp.float32),
        "w1": scale * jax.random.normal(keys[4], (E, H), jnp.float32),
        "w2": scale * jax.random.normal(keys[5], (E, H), jnp.float32),
        "w3": scale * jax.random.normal(keys[6], (H, E), jnp.float32),
    }
    x = jax.random.normal(keys[7], (B, S, E), jnp.float32)
    cos, sin = precompute_rope(Dh, S)

    out = transformer_block(x, params, cos, sin, num_heads=cfg["n_heads"])
    out = jax.block_until_ready(out)

    ref = reference(x, params, cos, sin, num_heads=cfg["n_heads"])
    assert out.shape == (B, S, E)
    max_err = float(jnp.max(jnp.abs(out - ref)))
    # bf16 MXU operands + approx reciprocal -> compare against f32 reference loosely
    assert jnp.allclose(out, ref, rtol=1e-2, atol=1e-2), max_err
    print("KERNEL_OK")
</pallas_src>

<mosaic_0001>
module attributes {stable_mosaic.version = 11 : i64} {
  func.func @qkv_rope_kernel(%arg0: i32, %arg1: i32, %arg2: memref<1x8x32xf32, #tpu.memory_space<vmem>>, %arg3: memref<1x32xf32, #tpu.memory_space<vmem>>, %arg4: memref<32x96xbf16, #tpu.memory_space<vmem>>, %arg5: memref<8x32xf32, #tpu.memory_space<vmem>>, %arg6: memref<8x32xf32, #tpu.memory_space<vmem>>, %arg7: memref<1x8x32xbf16, #tpu.memory_space<vmem>>, %arg8: memref<1x8x32xbf16, #tpu.memory_space<vmem>>, %arg9: memref<1x8x32xbf16, #tpu.memory_space<vmem>>) attributes {dimension_semantics = [#tpu.dimension_semantics<parallel>, #tpu.dimension_semantics<parallel>], iteration_bounds = array<i64: 2, 1>, scalar_prefetch = 0 : i64, scratch_operands = 0 : i64, tpu.core_type = #tpu.core_type<tc>, window_params = [{transform_indices = @transform_0, window_bounds = array<i64: 1, 8, 32>}, {pipeline_mode = #tpu.pipeline_mode<synchronous>, transform_indices = @transform_1, window_bounds = array<i64: 1, 32>}, {pipeline_mode = #tpu.pipeline_mode<synchronous>, transform_indices = @transform_2, window_bounds = array<i64: 32, 96>}, {transform_indices = @transform_3, window_bounds = array<i64: 8, 32>}, {transform_indices = @transform_4, window_bounds = array<i64: 8, 32>}, {transform_indices = @transform_5, window_bounds = array<i64: 1, 8, 32>}, {transform_indices = @transform_6, window_bounds = array<i64: 1, 8, 32>}, {transform_indices = @transform_7, window_bounds = array<i64: 1, 8, 32>}]} {
    %c0 = arith.constant 0 : index
    %c0_0 = arith.constant 0 : index
    %c0_1 = arith.constant 0 : index
    %0 = vector.load %arg2[%c0, %c0_0, %c0_1] : memref<1x8x32xf32, #tpu.memory_space<vmem>>, vector<1x8x32xf32>
    %1 = vector.shape_cast %0 : vector<1x8x32xf32> to vector<8x32xf32>
    %c0_2 = arith.constant 0 : index
    %c0_3 = arith.constant 0 : index
    %2 = vector.load %arg3[%c0_2, %c0_3] : memref<1x32xf32, #tpu.memory_space<vmem>>, vector<1x32xf32>
    %3 = arith.mulf %1, %1 : vector<8x32xf32>
    %cst = arith.constant dense<0.000000e+00> : vector<8xf32>
    %4 = vector.multi_reduction <add>, %3, %cst [1] : vector<8x32xf32> to vector<8xf32>
    %5 = vector.shape_cast %4 : vector<8xf32> to vector<8x1xf32>
    %cst_4 = arith.constant 3.200000e+01 : f32
    %6 = vector.broadcast %cst_4 : f32 to vector<8x1xf32>
    %7 = arith.divf %5, %6 : vector<8x1xf32>
    %cst_5 = arith.constant 9.99999974E-6 : f32
    %8 = vector.broadcast %cst_5 : f32 to vector<8x1xf32>
    %9 = arith.addf %7, %8 : vector<8x1xf32>
    %10 = math.rsqrt %9 : vector<8x1xf32>
    %11 = vector.broadcast %10 : vector<8x1xf32> to vector<8x32xf32>
    %12 = arith.mulf %1, %11 : vector<8x32xf32>
    %13 = vector.broadcast %2 : vector<1x32xf32> to vector<8x32xf32>
    %14 = arith.mulf %12, %13 : vector<8x32xf32>
    %15 = arith.truncf %14 : vector<8x32xf32> to vector<8x32xbf16>
    %c0_6 = arith.constant 0 : index
    %c0_7 = arith.constant 0 : index
    %16 = vector.load %arg4[%c0_6, %c0_7] : memref<32x96xbf16, #tpu.memory_space<vmem>>, vector<32x96xbf16>
    %cst_8 = arith.constant dense<0.000000e+00> : vector<8x96xf32>
    %17 = tpu.matmul %15, %16, %cst_8 {dimension_numbers = #tpu.dot_dimension_numbers<[1], [0], [0], [1], [0, 0, 1, 1], [], []>} : vector<8x32xbf16>, vector<32x96xbf16>, vector<8x96xf32> -> vector<8x96xf32>
    %c0_9 = arith.constant 0 : index
    %c0_10 = arith.constant 0 : index
    %18 = vector.load %arg5[%c0_9, %c0_10] : memref<8x32xf32, #tpu.memory_space<vmem>>, vector<8x32xf32>
    %c0_11 = arith.constant 0 : index
    %c0_12 = arith.constant 0 : index
    %19 = vector.load %arg6[%c0_11, %c0_12] : memref<8x32xf32, #tpu.memory_space<vmem>>, vector<8x32xf32>
    %20 = vector.extract_strided_slice %17 {offsets = [0, 0], sizes = [8, 32], strides = [1, 1]} : vector<8x96xf32> to vector<8x32xf32>
    %21 = vector.extract_strided_slice %20 {offsets = [0, 4], sizes = [8, 4], strides = [1, 1]} : vector<8x32xf32> to vector<8x4xf32>
    %22 = vector.extract_strided_slice %20 {offsets = [0, 0], sizes = [8, 4], strides = [1, 1]} : vector<8x32xf32> to vector<8x4xf32>
    %23 = vector.extract_strided_slice %20 {offsets = [0, 12], sizes = [8, 4], strides = [1, 1]} : vector<8x32xf32> to vector<8x4xf32>
    %24 = vector.extract_strided_slice %20 {offsets = [0, 8], sizes = [8, 4], strides = [1, 1]} : vector<8x32xf32> to vector<8x4xf32>
    %25 = vector.extract_strided_slice %20 {offsets = [0, 20], sizes = [8, 4], strides = [1, 1]} : vector<8x32xf32> to vector<8x4xf32>
    %26 = vector.extract_strided_slice %20 {offsets = [0, 16], sizes = [8, 4], strides = [1, 1]} : vector<8x32xf32> to vector<8x4xf32>
    %27 = vector.extract_strided_slice %20 {offsets = [0, 28], sizes = [8, 4], strides = [1, 1]} : vector<8x32xf32> to vector<8x4xf32>
    %28 = vector.extract_strided_slice %20 {offsets = [0, 24], sizes = [8, 4], strides = [1, 1]} : vector<8x32xf32> to vector<8x4xf32>
    %29 = tpu.concatenate %21, %22, %23, %24, %25, %26, %27, %28 in 1 : vector<8x4xf32>, vector<8x4xf32>, vector<8x4xf32>, vector<8x4xf32>, vector<8x4xf32>, vector<8x4xf32>, vector<8x4xf32>, vector<8x4xf32> -> vector<8x32xf32>
    %30 = arith.mulf %20, %18 : vector<8x32xf32>
    %31 = arith.mulf %29, %19 : vector<8x32xf32>
    %32 = arith.addf %30, %31 : vector<8x32xf32>
    %33 = arith.truncf %32 : vector<8x32xf32> to vector<8x32xbf16>
    %c0_13 = arith.constant 0 : index
    %c0_14 = arith.constant 0 : index
    %c0_15 = arith.constant 0 : index
    %34 = vector.load %arg7[%c0_13, %c0_14, %c0_15] : memref<1x8x32xbf16, #tpu.memory_space<vmem>>, vector<1x8x32xbf16>
    %35 = vector.shape_cast %34 : vector<1x8x32xbf16> to vector<8x32xbf16>
    %36 = vector.shape_cast %33 : vector<8x32xbf16> to vector<1x8x32xbf16>
    tpu.vector_store %arg7[%c0_13, %c0_14, %c0_15], %36 {strides = array<i32>} : memref<1x8x32xbf16, #tpu.memory_space<vmem>>, vector<1x8x32xbf16>,
    %37 = vector.extract_strided_slice %17 {offsets = [0, 32], sizes = [8, 32], strides = [1, 1]} : vector<8x96xf32> to vector<8x32xf32>
    %38 = vector.extract_strided_slice %37 {offsets = [0, 4], sizes = [8, 4], strides = [1, 1]} : vector<8x32xf32> to vector<8x4xf32>
    %39 = vector.extract_strided_slice %37 {offsets = [0, 0], sizes = [8, 4], strides = [1, 1]} : vector<8x32xf32> to vector<8x4xf32>
    %40 = vector.extract_strided_slice %37 {offsets = [0, 12], sizes = [8, 4], strides = [1, 1]} : vector<8x32xf32> to vector<8x4xf32>
    %41 = vector.extract_strided_slice %37 {offsets = [0, 8], sizes = [8, 4], strides = [1, 1]} : vector<8x32xf32> to vector<8x4xf32>
    %42 = vector.extract_strided_slice %37 {offsets = [0, 20], sizes = [8, 4], strides = [1, 1]} : vector<8x32xf32> to vector<8x4xf32>
    %43 = vector.extract_strided_slice %37 {offsets = [0, 16], sizes = [8, 4], strides = [1, 1]} : vector<8x32xf32> to vector<8x4xf32>
    %44 = vector.extract_strided_slice %37 {offsets = [0, 28], sizes = [8, 4], strides = [1, 1]} : vector<8x32xf32> to vector<8x4xf32>
    %45 = vector.extract_strided_slice %37 {offsets = [0, 24], sizes = [8, 4], strides = [1, 1]} : vector<8x32xf32> to vector<8x4xf32>
    %46 = tpu.concatenate %38, %39, %40, %41, %42, %43, %44, %45 in 1 : vector<8x4xf32>, vector<8x4xf32>, vector<8x4xf32>, vector<8x4xf32>, vector<8x4xf32>, vector<8x4xf32>, vector<8x4xf32>, vector<8x4xf32> -> vector<8x32xf32>
    %47 = arith.mulf %37, %18 : vector<8x32xf32>
    %48 = arith.mulf %46, %19 : vector<8x32xf32>
    %49 = arith.addf %47, %48 : vector<8x32xf32>
    %50 = arith.truncf %49 : vector<8x32xf32> to vector<8x32xbf16>
    %c0_16 = arith.constant 0 : index
    %c0_17 = arith.constant 0 : index
    %c0_18 = arith.constant 0 : index
    %51 = vector.load %arg8[%c0_16, %c0_17, %c0_18] : memref<1x8x32xbf16, #tpu.memory_space<vmem>>, vector<1x8x32xbf16>
    %52 = vector.shape_cast %51 : vector<1x8x32xbf16> to vector<8x32xbf16>
    %53 = vector.shape_cast %50 : vector<8x32xbf16> to vector<1x8x32xbf16>
    tpu.vector_store %arg8[%c0_16, %c0_17, %c0_18], %53 {strides = array<i32>} : memref<1x8x32xbf16, #tpu.memory_space<vmem>>, vector<1x8x32xbf16>,
    %54 = vector.extract_strided_slice %17 {offsets = [0, 64], sizes = [8, 32], strides = [1, 1]} : vector<8x96xf32> to vector<8x32xf32>
    %55 = arith.truncf %54 : vector<8x32xf32> to vector<8x32xbf16>
    %c0_19 = arith.constant 0 : index
    %c0_20 = arith.constant 0 : index
    %c0_21 = arith.constant 0 : index
    %56 = vector.load %arg9[%c0_19, %c0_20, %c0_21] : memref<1x8x32xbf16, #tpu.memory_space<vmem>>, vector<1x8x32xbf16>
    %57 = vector.shape_cast %56 : vector<1x8x32xbf16> to vector<8x32xbf16>
    %58 = vector.shape_cast %55 : vector<8x32xbf16> to vector<1x8x32xbf16>
    tpu.vector_store %arg9[%c0_19, %c0_20, %c0_21], %58 {strides = array<i32>} : memref<1x8x32xbf16, #tpu.memory_space<vmem>>, vector<1x8x32xbf16>,
    return
  }
  func.func @transform_0(%arg0: i32, %arg1: i32) -> (i32, i32, i32) {
    %c0_i32 = arith.constant 0 : i32
    %c0_i32_0 = arith.constant 0 : i32
    return %arg0, %arg1, %c0_i32 : i32, i32, i32
  }
  func.func @transform_1(%arg0: i32, %arg1: i32) -> (i32, i32) {
    %c0_i32 = arith.constant 0 : i32
    %c0_i32_0 = arith.constant 0 : i32
    %c0_i32_1 = arith.constant 0 : i32
    return %c0_i32, %c0_i32_0 : i32, i32
  }
  func.func @transform_2(%arg0: i32, %arg1: i32) -> (i32, i32) {
    %c0_i32 = arith.constant 0 : i32
    %c0_i32_0 = arith.constant 0 : i32
    %c0_i32_1 = arith.constant 0 : i32
    return %c0_i32, %c0_i32_0 : i32, i32
  }
  func.func @transform_3(%arg0: i32, %arg1: i32) -> (i32, i32) {
    %c0_i32 = arith.constant 0 : i32
    %c0_i32_0 = arith.constant 0 : i32
    return %arg1, %c0_i32 : i32, i32
  }
  func.func @transform_4(%arg0: i32, %arg1: i32) -> (i32, i32) {
    %c0_i32 = arith.constant 0 : i32
    %c0_i32_0 = arith.constant 0 : i32
    return %arg1, %c0_i32 : i32, i32
  }
  func.func @transform_5(%arg0: i32, %arg1: i32) -> (i32, i32, i32) {
    %c0_i32 = arith.constant 0 : i32
    %c0_i32_0 = arith.constant 0 : i32
    return %arg0, %arg1, %c0_i32 : i32, i32, i32
  }
  func.func @transform_6(%arg0: i32, %arg1: i32) -> (i32, i32, i32) {
    %c0_i32 = arith.constant 0 : i32
    %c0_i32_0 = arith.constant 0 : i32
    return %arg0, %arg1, %c0_i32 : i32, i32, i32
  }
  func.func @transform_7(%arg0: i32, %arg1: i32) -> (i32, i32, i32) {
    %c0_i32 = arith.constant 0 : i32
    %c0_i32_0 = arith.constant 0 : i32
    return %arg0, %arg1, %c0_i32 : i32, i32, i32
  }
}

</mosaic_0001>

<llo_original>
// kernel: tpu_custom_call.1
$region0: #{tpu_custom_call.1}
  #allocation0 [shape = 'u32[]', space=smem, size = 0x4, offset = 0x4, fixed_abs, tag = 'smem constant byte address 0x4 - core index']
  #allocation1 [shape = 'u32[144,128]{1,0:T(1,128)}', space=vmem, size = 0x12000, scoped, tag = 'internal scratch']
  %s0 = inlined_call_operand.hbm [shape: f32[2,8,32], index: 0, kind: input, shape index: {}]
  %s1 = inlined_call_operand.vmem [shape: f32[1,32], index: 1, kind: input, shape index: {}]
  %s2 = inlined_call_operand.hbm [shape: bf16[32,96], index: 2, kind: input, shape index: {}]
  %s3 = inlined_call_operand.vmem [shape: f32[8,32], index: 3, kind: input, shape index: {}]
  %s4 = inlined_call_operand.hbm [shape: f32[8,32], index: 4, kind: input, shape index: {}]
  %s5 = inlined_call_operand.hbm [shape: bf16[2,8,32], index: 5, kind: output, shape index: {0}]
  %s6 = inlined_call_operand.hbm [shape: bf16[2,8,32], index: 6, kind: output, shape index: {1}]
  %s7 = inlined_call_operand.hbm [shape: bf16[2,8,32], index: 7, kind: output, shape index: {2}]
  %8 = xla_tuple %s5, %s6, %s7
  %s9 = sld [smem:[#allocation0]]
  $region81: #{tpu_custom_call.1} parent=0
    _
  %s11 = ssub.s32 1, %s9
  %s12 = scalar_select 0, %s11, %s9
  $region1: #{tpu_custom_call.1} parent=0
    #allocation2 [shape = 'u8[8192]{0}', space=vmem, size = 0x2000, scoped, tag = 'input window, operand 0']
    #allocation3 [shape = 's32[2]{0}', space=sflag, size = 0x8, scoped, tag = 'scoped memory for tpu_custom_call.1']
    #allocation4 [shape = 's32[2]{0}', space=sflag, size = 0x8, scoped, tag = 'scoped memory for tpu_custom_call.1']
    #allocation5 [shape = 'u8[8192]{0}', space=vmem, size = 0x2000, scoped, tag = 'input window, operand 2, single buffered']
    #allocation6 [shape = 's32[1]{0}', space=sflag, size = 0x4, scoped, tag = 'scoped memory for tpu_custom_call.1']
    #allocation7 [shape = 'u8[4096]{0}', space=vmem, size = 0x1000, scoped, tag = 'input window, operand 4, single buffered']
    #allocation8 [shape = 'u8[4096]{0}', space=vmem, size = 0x1000, scoped, tag = 'output window, operand 0']
    #allocation9 [shape = 'u8[4096]{0}', space=vmem, size = 0x1000, scoped, tag = 'output window, operand 1']
    #allocation10 [shape = 's32[2]{0}', space=sflag, size = 0x8, scoped, tag = 'scoped memory for tpu_custom_call.1']
    #allocation11 [shape = 'u8[4096]{0}', space=vmem, size = 0x1000, scoped, tag = 'output window, operand 2']
    %13 = vsyncpa [#allocation3], 0
    %s14 = scalar_lea.sflag [#allocation3], 1
    %15 = vsyncpa %s14, 0
    %16 = vsyncpa [#allocation6], 0
    %17 = vsyncpa [#allocation4], 0
    %s18 = scalar_lea.sflag [#allocation4], 1
    %19 = vsyncpa %s18, 0
    %20 = vsyncpa [#allocation10], 0
    %s21 = scalar_lea.sflag [#allocation10], 1
    %22 = vsyncpa %s21, 0
    loop: start=0, step=1, limit=4
    $region2: #{tpu_custom_call.1} parent=1 // loop_pre_header
      _
    $region3: #{tpu_custom_call.1} parent=1 // loop_header
      %s24 = sphi 0, %s28
      %p25 = scmp.ge.s32.totalorder %s24, 4
      %s31 = sphi 0, %s43
      %s32 = sphi 0, %s39
      %s33 = sphi 0, %s31
      %s34 = sphi 0, %s32
      %s35 = sphi 0, %s33
      %s36 = sphi 0, %s34
      %s48 = sphi 0, %s50
      %s51 = sphi 0, %s48
      %s52 = sphi 0, %s51
      %s68 = sphi 0, %s52
      %s72 = sphi 0, %s72
      %s74 = sphi 0, %s72
      %s75 = sphi 0, %s74
      %s89 = sphi 0, %s75
      %s93 = sphi 0, %s93
      %s95 = sphi 0, %s93
      %s96 = sphi 0, %s95
      %s110 = sphi 0, %s96
      %s116 = sphi 0, %s118
      %s119 = sphi 0, %s116
      %s120 = sphi 0, %s119
      %s136 = sphi 0, %s120
      %s142 = sphi 0, %s144
      %s145 = sphi 0, %s142
      %s146 = sphi 0, %s145
      %s162 = sphi 0, %s146
      %s170 = sphi 0, %s172
      %s173 = sphi 0, %s170
      %s174 = sphi 0, %s173
      %s190 = sphi 0, %s174
      %s198 = sphi 0, %s200
      %s201 = sphi 0, %s198
      %s202 = sphi 0, %s201
      %s218 = sphi 0, %s202
      %s226 = sphi 0, %s228
      %s229 = sphi 0, %s226
      %s230 = sphi 0, %s229
      %s246 = sphi 0, %s230
    $region4: #{tpu_custom_call.1} parent=1 // loop_header_branch
      %27 = sbr.rel (%p25) target = $region8
    $region5: #{tpu_custom_call.1} parent=1 // loop_body
      %s29 = ssub.s32 %s24, 1
      %s30 = ssub.s32 %s24, 2
      %s37 = sadd.s32 1, %s32
      %p38 = scmp.ge.s32.totalorder %s37, 1
      %s39 = scalar_select %p38, 0, %s37
      %s40 = sadd.s32 1, %s31
      %s41 = scalar_select %p38, %s40, %s31
      %p42 = scmp.ge.s32.totalorder %s41, 2
      %s43 = scalar_select %p42, 0, %s41
      %s44 = ssub.s32 %s31, %s43
      %s45 = ssub.s32 %s32, %s39
      %s46 = sor.u32 %s44, %s45
      %p47 = scmp.eq.s32.totalorder %s46, 0
      %s49 = sadd.s32 %s48, 1
      %s50 = scalar_select %p47, %s48, %s49
      %p53 = pneg %p47
      %p54 = scmp.eq.s32.totalorder %s24, 1
      %p55 = por %p53, %p54
      %p56 = scmp.ne.s32.totalorder %s48, %s51
      %p57 = scmp.eq.s32.totalorder %s24, 0
      %p58 = por %p56, %p57
      %p59 = scmp.ne.s32.totalorder %s48, %s51
      %p60 = scmp.eq.s32.totalorder %s29, 1
      %p61 = por %p59, %p60
      %p62 = scmp.ne.s32.totalorder %s51, %s52
      %p63 = scmp.eq.s32.totalorder %s29, 0
      %p64 = por %p62, %p63
      %p65 = scmp.ne.s32.totalorder %s51, %s52
      %p66 = scmp.eq.s32.totalorder %s30, 1
      %p67 = por %p65, %p66
      %p69 = scmp.ne.s32.totalorder %s52, %s68
      %p70 = scmp.eq.s32.totalorder %s30, 0
      %p71 = por %p69, %p70
      %s73 = sadd.s32 %s72, 1
      %p76 = scmp.eq.s32.totalorder %s24, 1
      %p77 = scmp.ne.s32.totalorder %s72, %s74
      %p78 = scmp.eq.s32.totalorder %s24, 0
      %p79 = por %p77, %p78
      %p80 = scmp.ne.s32.totalorder %s72, %s74
      %p81 = scmp.eq.s32.totalorder %s29, 1
      %p82 = por %p80, %p81
      %p83 = scmp.ne.s32.totalorder %s74, %s75
      %p84 = scmp.eq.s32.totalorder %s29, 0
      %p85 = por %p83, %p84
      %p86 = scmp.ne.s32.totalorder %s74, %s75
      %p87 = scmp.eq.s32.totalorder %s30, 1
      %p88 = por %p86, %p87
      %p90 = scmp.ne.s32.totalorder %s75, %s89
      %p91 = scmp.eq.s32.totalorder %s30, 0
      %p92 = por %p90, %p91
      %s94 = sadd.s32 %s93, 1
      %p97 = scmp.eq.s32.totalorder %s24, 1
      %p98 = scmp.ne.s32.totalorder %s93, %s95
      %p99 = scmp.eq.s32.totalorder %s24, 0
      %p100 = por %p98, %p99
      %p101 = scmp.ne.s32.totalorder %s93, %s95
      %p102 = scmp.eq.s32.totalorder %s29, 1
      %p103 = por %p101, %p102
      %p104 = scmp.ne.s32.totalorder %s95, %s96
      %p105 = scmp.eq.s32.totalorder %s29, 0
      %p106 = por %p104, %p105
      %p107 = scmp.ne.s32.totalorder %s95, %s96
      %p108 = scmp.eq.s32.totalorder %s30, 1
      %p109 = por %p107, %p108
      %p111 = scmp.ne.s32.totalorder %s96, %s110
      %p112 = scmp.eq.s32.totalorder %s30, 0
      %p113 = por %p111, %p112
      %s114 = ssub.s32 %s32, %s39
      %p115 = scmp.eq.s32.totalorder %s114, 0
      %s117 = sadd.s32 %s116, 1
      %s118 = scalar_select %p115, %s116, %s117
      %p121 = pneg %p115
      %p122 = scmp.eq.s32.totalorder %s24, 1
      %p123 = por %p121, %p122
      %p124 = scmp.ne.s32.totalorder %s116, %s119
      %p125 = scmp.eq.s32.totalorder %s24, 0
      %p126 = por %p124, %p125
      %p127 = scmp.ne.s32.totalorder %s116, %s119
      %p128 = scmp.eq.s32.totalorder %s29, 1
      %p129 = por %p127, %p128
      %p130 = scmp.ne.s32.totalorder %s119, %s120
      %p131 = scmp.eq.s32.totalorder %s29, 0
      %p132 = por %p130, %p131
      %p133 = scmp.ne.s32.totalorder %s119, %s120
      %p134 = scmp.eq.s32.totalorder %s30, 1
      %p135 = por %p133, %p134
      %p137 = scmp.ne.s32.totalorder %s120, %s136
      %p138 = scmp.eq.s32.totalorder %s30, 0
      %p139 = por %p137, %p138
      %s140 = ssub.s32 %s32, %s39
      %p141 = scmp.eq.s32.totalorder %s140, 0
      %s143 = sadd.s32 %s142, 1
      %s144 = scalar_select %p141, %s142, %s143
      %p147 = pneg %p141
      %p148 = scmp.eq.s32.totalorder %s24, 1
      %p149 = por %p147, %p148
      %p150 = scmp.ne.s32.totalorder %s142, %s145
      %p151 = scmp.eq.s32.totalorder %s24, 0
      %p152 = por %p150, %p151
      %p153 = scmp.ne.s32.totalorder %s142, %s145
      %p154 = scmp.eq.s32.totalorder %s29, 1
      %p155 = por %p153, %p154
      %p156 = scmp.ne.s32.totalorder %s145, %s146
      %p157 = scmp.eq.s32.totalorder %s29, 0
      %p158 = por %p156, %p157
      %p159 = scmp.ne.s32.totalorder %s145, %s146
      %p160 = scmp.eq.s32.totalorder %s30, 1
      %p161 = por %p159, %p160
      %p163 = scmp.ne.s32.totalorder %s146, %s162
      %p164 = scmp.eq.s32.totalorder %s30, 0
      %p165 = por %p163, %p164
      %s166 = ssub.s32 %s31, %s43
      %s167 = ssub.s32 %s32, %s39
      %s168 = sor.u32 %s166, %s167
      %p169 = scmp.eq.s32.totalorder %s168, 0
      %s171 = sadd.s32 %s170, 1
      %s172 = scalar_select %p169, %s170, %s171
      %p175 = pneg %p169
      %p176 = scmp.eq.s32.totalorder %s24, 1
      %p177 = por %p175, %p176
      %p178 = scmp.ne.s32.totalorder %s170, %s173
      %p179 = scmp.eq.s32.totalorder %s24, 0
      %p180 = por %p178, %p179
      %p181 = scmp.ne.s32.totalorder %s170, %s173
      %p182 = scmp.eq.s32.totalorder %s29, 1
      %p183 = por %p181, %p182
      %p184 = scmp.ne.s32.totalorder %s173, %s174
      %p185 = scmp.eq.s32.totalorder %s29, 0
      %p186 = por %p184, %p185
      %p187 = scmp.ne.s32.totalorder %s173, %s174
      %p188 = scmp.eq.s32.totalorder %s30, 1
      %p189 = por %p187, %p188
      %p191 = scmp.ne.s32.totalorder %s174, %s190
      %p192 = scmp.eq.s32.totalorder %s30, 0
      %p193 = por %p191, %p192
      %s194 = ssub.s32 %s31, %s43
      %s195 = ssub.s32 %s32, %s39
      %s196 = sor.u32 %s194, %s195
      %p197 = scmp.eq.s32.totalorder %s196, 0
      %s199 = sadd.s32 %s198, 1
      %s200 = scalar_select %p197, %s198, %s199
      %p203 = pneg %p197
      %p204 = scmp.eq.s32.totalorder %s24, 1
      %p205 = por %p203, %p204
      %p206 = scmp.ne.s32.totalorder %s198, %s201
      %p207 = scmp.eq.s32.totalorder %s24, 0
      %p208 = por %p206, %p207
      %p209 = scmp.ne.s32.totalorder %s198, %s201
      %p210 = scmp.eq.s32.totalorder %s29, 1
      %p211 = por %p209, %p210
      %p212 = scmp.ne.s32.totalorder %s201, %s202
      %p213 = scmp.eq.s32.totalorder %s29, 0
      %p214 = por %p212, %p213
      %p215 = scmp.ne.s32.totalorder %s201, %s202
      %p216 = scmp.eq.s32.totalorder %s30, 1
      %p217 = por %p215, %p216
      %p219 = scmp.ne.s32.totalorder %s202, %s218
      %p220 = scmp.eq.s32.totalorder %s30, 0
      %p221 = por %p219, %p220
      %s222 = ssub.s32 %s31, %s43
      %s223 = ssub.s32 %s32, %s39
      %s224 = sor.u32 %s222, %s223
      %p225 = scmp.eq.s32.totalorder %s224, 0
      %s227 = sadd.s32 %s226, 1
      %s228 = scalar_select %p225, %s226, %s227
      %p231 = pneg %p225
      %p232 = scmp.eq.s32.totalorder %s24, 1
      %p233 = por %p231, %p232
      %p234 = scmp.ne.s32.totalorder %s226, %s229
      %p235 = scmp.eq.s32.totalorder %s24, 0
      %p236 = por %p234, %p235
      %p237 = scmp.ne.s32.totalorder %s226, %s229
      %p238 = scmp.eq.s32.totalorder %s29, 1
      %p239 = por %p237, %p238
      %p240 = scmp.ne.s32.totalorder %s229, %s230
      %p241 = scmp.eq.s32.totalorder %s29, 0
      %p242 = por %p240, %p241
      %p243 = scmp.ne.s32.totalorder %s229, %s230
      %p244 = scmp.eq.s32.totalorder %s30, 1
      %p245 = por %p243, %p244
      %p247 = scmp.ne.s32.totalorder %s230, %s246
      %p248 = scmp.eq.s32.totalorder %s30, 0
      %p249 = por %p247, %p248
      %p250 = scmp.le.s32.totalorder 1, %s24
      %p251 = scmp.lt.s32.totalorder %s24, 3
      %p252 = pnand %p250, %p251
      %p253 = pneg %p252
      // Predicated region
      $region9: #{tpu_custom_call.1} parent=5 // pred_check
        _
      $region10: #{tpu_custom_call.1} parent=5 // pred_check_branch
        %255 = sbr.rel (%p252) target = $region12
      $region11: #{tpu_custom_call.1} parent=5 // pred_region
        %s256 = ssub.s32 %s24, 1
        // Predicated region
        $region13: #{tpu_custom_call.1} parent=11 // pred_check
          %p257 = pneg %p85
        $region14: #{tpu_custom_call.1} parent=11 // pred_check_branch
          %259 = sbr.rel (%p257) target = $region16
        $region15: #{tpu_custom_call.1} parent=11 // pred_region
          _
        $region16: #{tpu_custom_call.1} parent=11 // pred_fallthru
          _
        // Predicated region
        $region17: #{tpu_custom_call.1} parent=11 // pred_check
          %p260 = pneg %p106
        $region18: #{tpu_custom_call.1} parent=11 // pred_check_branch
          %262 = sbr.rel (%p260) target = $region20
        $region19: #{tpu_custom_call.1} parent=11 // pred_region
          %s264 = ssub.s32 256, 256
          %265 = vsyncadd [#allocation6], %s264
          %s266 = sshll.u32 [#allocation5], 4
          %s267 = int_to_ptr.vmem [resolvable:$true] %s266
          %272 = dma.hbm_to_vmem [thread:$0]  %s2, 256, %s267, [#allocation6], 64, 64, 4
        $region20: #{tpu_custom_call.1} parent=11 // pred_fallthru
          _
        // Predicated region
        $region21: #{tpu_custom_call.1} parent=11 // pred_check
          %p273 = pneg %p132
        $region22: #{tpu_custom_call.1} parent=11 // pred_check_branch
          %275 = sbr.rel (%p273) target = $region24
        $region23: #{tpu_custom_call.1} parent=11 // pred_region
          %p276 = scmp.lt.s32.totalorder %s34, 0
          %s277 = scalar_select %p276, %s34, 0
          %s278 = smul.addr %s277, 8
          %s279 = scalar_lea.vmem %s3, %s278
        $region24: #{tpu_custom_call.1} parent=11 // pred_fallthru
          _
        // Predicated region
        $region25: #{tpu_custom_call.1} parent=11 // pred_check
          %p280 = pneg %p158
        $region26: #{tpu_custom_call.1} parent=11 // pred_check_branch
          %282 = sbr.rel (%p280) target = $region28
        $region27: #{tpu_custom_call.1} parent=11 // pred_region
          %s284 = ssub.s32 128, 128
          %285 = vsyncadd [#allocation6], %s284
          %s286 = smul.addr %s34, 128
          %s287 = scalar_lea.hbm %s4, %s286
          %s289 = sshll.u32 [#allocation7], 4
          %s290 = int_to_ptr.vmem [resolvable:$true] %s289
          %292 = dma.hbm_to_vmem [thread:$0]  %s287, 128, %s290, [#allocation6]
        $region28: #{tpu_custom_call.1} parent=11 // pred_fallthru
          _
      $region12: #{tpu_custom_call.1} parent=5 // pred_fallthru
        _
      %p293 = scmp.lt.s32.totalorder %s24, 2
      // Predicated region
      $region29: #{tpu_custom_call.1} parent=5 // pred_check
        %p294 = pneg %p293
      $region30: #{tpu_custom_call.1} parent=5 // pred_check_branch
        %296 = sbr.rel (%p294) target = $region32
      $region31: #{tpu_custom_call.1} parent=5 // pred_region
        // Predicated region
        $region33: #{tpu_custom_call.1} parent=31 // pred_check
          %p297 = pneg %p58
        $region34: #{tpu_custom_call.1} parent=31 // pred_check_branch
          %299 = sbr.rel (%p297) target = $region36
        $region35: #{tpu_custom_call.1} parent=31 // pred_region
          %s300 = sand.u32 %s48, 1
          %s301 = scalar_lea.sflag [#allocation3], %s300
          %s302 = sand.u32 %s48, 1
          %s303 = smul.addr %s302, 8
          %s304 = scalar_lea.vmem [#allocation2], %s303
          %s306 = ssub.s32 128, 128
          %307 = vsyncadd %s301, %s306
          %s308 = sadd.s32 %s32, %s31
          %s309 = smul.addr %s308, 128
          %s310 = scalar_lea.hbm %s0, %s309
          %s312 = sshll.u32 %s304, 4
          %s313 = int_to_ptr.vmem [resolvable:$true] %s312
          %315 = dma.hbm_to_vmem [thread:$0]  %s310, 128, %s313, %s301
        $region36: #{tpu_custom_call.1} parent=31 // pred_fallthru
          _
      $region32: #{tpu_custom_call.1} parent=5 // pred_fallthru
        _
      %p316 = scmp.le.s32.totalorder 1, %s24
      %p317 = scmp.lt.s32.totalorder %s24, 3
      %p318 = pnand %p316, %p317
      %p319 = pneg %p318
      // Predicated region
      $region37: #{tpu_custom_call.1} parent=5 // pred_check
        _
      $region38: #{tpu_custom_call.1} parent=5 // pred_check_branch
        %321 = sbr.rel (%p318) target = $region40
      $region39: #{tpu_custom_call.1} parent=5 // pred_region
        %s322 = ssub.s32 %s24, 1
        %s323 = sand.u32 %s51, 1
        %s324 = scalar_lea.sflag [#allocation3], %s323
        %s325 = sand.u32 %s51, 1
        %s326 = smul.addr %s325, 8
        %s327 = scalar_lea.vmem [#allocation2], %s326
        // Predicated region
        $region41: #{tpu_custom_call.1} parent=39 // pred_check
          %p328 = pneg %p64
        $region42: #{tpu_custom_call.1} parent=39 // pred_check_branch
          %330 = sbr.rel (%p328) target = $region44
        $region43: #{tpu_custom_call.1} parent=39 // pred_region
          %331 = dma.done %s324, 128
        $region44: #{tpu_custom_call.1} parent=39 // pred_fallthru
          _
        // Predicated region
        $region45: #{tpu_custom_call.1} parent=39 // pred_check
          %p332 = pneg %p106
        $region46: #{tpu_custom_call.1} parent=39 // pred_check_branch
          %334 = sbr.rel (%p332) target = $region48
        $region47: #{tpu_custom_call.1} parent=39 // pred_region
          %335 = dma.done [#allocation6], 256
        $region48: #{tpu_custom_call.1} parent=39 // pred_fallthru
          _
        // Predicated region
        $region49: #{tpu_custom_call.1} parent=39 // pred_check
          %p336 = pneg %p158
        $region50: #{tpu_custom_call.1} parent=39 // pred_check_branch
          %338 = sbr.rel (%p336) target = $region52
        $region51: #{tpu_custom_call.1} parent=39 // pred_region
          %339 = dma.done [#allocation6], 128
        $region52: #{tpu_custom_call.1} parent=39 // pred_fallthru
          _
        %s340 = sand.u32 %s51, 1
        %s341 = scalar_lea.sflag [#allocation3], %s340
        %s342 = sand.u32 %s51, 1
        %s343 = smul.addr %s342, 8
        %s344 = scalar_lea.vmem [#allocation2], %s343
        %p345 = pneg %p64
        %p346 = pneg %p61
        %p347 = pneg %p85
        %p348 = pneg %p82
        %p349 = pneg %p106
        %p350 = pneg %p103
        %p351 = scmp.lt.s32.totalorder %s34, 0
        %s352 = scalar_select %p351, %s34, 0
        %s353 = smul.addr %s352, 8
        %s354 = scalar_lea.vmem %s3, %s353
        %p355 = pneg %p132
        %p356 = pneg %p129
        %p357 = pneg %p158
        %p358 = pneg %p155
        %p359 = pneg %p186
        %p360 = pneg %p183
        %s361 = sand.u32 %s173, 1
        %s362 = scalar_lea.sflag [#allocation4], %s361
        %s363 = sand.u32 %s173, 1
        %s364 = smul.addr %s363, 4
        %s365 = scalar_lea.vmem [#allocation8], %s364
        %p366 = pneg %p214
        %p367 = pneg %p211
        %s368 = sand.u32 %s29, 1
        %s369 = scalar_lea.sflag [#allocation10], %s368
        %s370 = sand.u32 %s201, 1
        %s371 = smul.addr %s370, 4
        %s372 = scalar_lea.vmem [#allocation9], %s371
        %p373 = pneg %p242
        %p374 = pneg %p239
        %s375 = sand.u32 %s29, 1
        %s376 = scalar_lea.sflag [#allocation10], %s375
        %s377 = sand.u32 %s229, 1
        %s378 = smul.addr %s377, 4
        %s379 = scalar_lea.vmem [#allocation11], %s378
        %p380 = scmp.lt.s32.totalorder %s34, 0
        %s381 = scalar_select %p380, %s34, 0
        %s382 = smul.addr %s381, 8
        %s383 = scalar_lea.vmem %s3, %s382
        %v385 = vld [vmem:[%s327] sm:$0xff]
        %v386 = vld [vmem:[%s1] sm:$0x1]
        %v387 = vmul.f32 %v385, %v385
        %vm388 = vcmask 261120
        %v389 = vsel %vm388, %v387, 0.0
        %390 = vadd.xlane.f32.xlu0 %v389
        %v391 = vpop.xlane.xlu0 %390
        %v392 = vrcp.pop 32.0
        %v393 = vmul.f32 %v391, %v392
        %v394 = vadd.f32 %v393, 1e-05
        %v395 = vrsqrt.pop %v394
        %v396 = vmul.f32 %v385, %v395
        %v398 = vlaneseq
        %v399 = vshrl.u32 %v398, 7
        %v400 = vsub.s32 0, %v399
        %v401 = vrot.slane %v386, %v400
        %v403 = vmul.f32 %v396, %v401
        %v404 = vpack.c.bf16 %v403, %v403
        %v405 = vld [vmem:[#allocation5] sm:$0xf]
        %v406 = vld [vmem:[#allocation5 + $0x4] sm:$0xf]
        %v407 = vld [vmem:[#allocation5 + $0x8] sm:$0xf]
        %v408 = vld [vmem:[#allocation5 + $0xc] sm:$0xf]
        %v413 = vunpack.c.l.b16 %v405
        %v414 = vunpack.c.l.b16 %v406
        %v415 = vunpack.c.l.b16 %v407
        %v416 = vunpack.c.l.b16 %v408
        %v417 = vpack.c.b16 %v414, %v413
        %v418 = vpack.c.b16 %v416, %v415
        %v422 = vsel %vm388, %v404, 0
        %424 = vmatprep.subr.bf16.mxu0 0
        %425 = vmatpush1.bf16.msra.mxu0 %v417
        %426 = vmatprep.subr.bf16.mxu0 0
        %427 = vmatpush1.bf16.msra.mxu0 %v418
        %428 = vmatprep.subr.bf16.mxu0 0
        %429 = vmatpush1.bf16.msra.mxu0 0
        %430 = vmatprep.subr.bf16.mxu0 0
        %431 = vmatpush1.bf16.msra.mxu0 0
        %432 = vmatprep.subr.bf16.mxu0 0
        %433 = vmatpush1.bf16.msra.mxu0 0
        %434 = vmatprep.subr.bf16.mxu0 0
        %435 = vmatpush1.bf16.msra.mxu0 0
        %436 = vmatprep.subr.bf16.mxu0 0
        %437 = vmatpush1.bf16.msra.mxu0 0
        %438 = vmatprep.subr.bf16.mxu0 0
        %439 = vmatpush1.bf16.msra.mxu0 0
        %440 = vmatprep.subr.bf16.mxu0 0
        %441 = vmatpush1.bf16.msra.mxu0 0
        %442 = vmatprep.subr.bf16.mxu0 0
        %443 = vmatpush1.bf16.msra.mxu0 0
        %444 = vmatprep.subr.bf16.mxu0 0
        %445 = vmatpush1.bf16.msra.mxu0 0
        %446 = vmatprep.subr.bf16.mxu0 0
        %447 = vmatpush1.bf16.msra.mxu0 0
        %448 = vmatprep.subr.bf16.mxu0 0
        %449 = vmatpush1.bf16.msra.mxu0 0
        %450 = vmatprep.subr.bf16.mxu0 0
        %451 = vmatpush1.bf16.msra.mxu0 0
        %452 = vmatprep.subr.bf16.mxu0 0
        %453 = vmatpush1.bf16.msra.mxu0 0
        %454 = vmatprep.subr.bf16.mxu0 0
        %455 = vmatpush1.bf16.msra.mxu0 0
        %456 = vmatprep.mubr.bf16.mxu0 0
        %457 = vmatmul.mubr.bf16.gmra.mrb[0].mxu0 %v422
        %v458 = vpop.f32.mrb[0].mxu0
        %v459 = vadd.f32 0.0, %v458
        %v460 = vpop.f32.mrb[0].mxu0
        %v461 = vpop.f32.mrb[0].mxu0
        %v462 = vpop.f32.mrb[0].mxu0
        %463 = vdwg.mxu0
        %v464 = vld [vmem:[%s383] sm:$0xff]
        %v465 = vld [vmem:[#allocation7] sm:$0xff]
        %467 = vrot.lane.b32.xlu0 %v459, 124
        %v468 = vpop.permute.xlu0 %467
        %470 = vrot.lane.b32.xlu0 %v459, 4
        %v471 = vpop.permute.xlu0 %470
        %vm473 = vcmask 31744
        %v474 = vsel %vm473, %v468, %v471
        %vm475 = vcmask 64512
        %v476 = vsel %vm475, %v474, %v468
        %vm477 = vcmask 97280
        %v478 = vsel %vm477, %v476, %v471
        %vm479 = vcmask 130048
        %v480 = vsel %vm479, %v478, %v468
        %vm481 = vcmask 162816
        %v482 = vsel %vm481, %v480, %v471
        %vm483 = vcmask 195584
        %v484 = vsel %vm483, %v482, %v468
        %vm485 = vcmask 228352
        %v486 = vsel %vm485, %v484, %v471
        %v487 = vmul.f32 %v459, %v464
        %v488 = vmul.f32 %v486, %v465
        %v489 = vadd.f32 %v487, %v488
        %v490 = vpack.c.bf16 %v489, %v489
        %vm491 = vcmask 257024
        %492 = vst.msk [vmem:[%s365] sm:$0xf] %vm491, %v490
        %493 = vrot.lane.b32.xlu0 %v459, 92
        %v494 = vpop.permute.xlu0 %493
        %496 = vrot.lane.b32.xlu0 %v459, 100
        %v497 = vpop.permute.xlu0 %496
        %v499 = vsel %vm473, %v494, %v497
        %v500 = vsel %vm475, %v499, %v494
        %v501 = vsel %vm477, %v500, %v497
        %v502 = vsel %vm479, %v501, %v494
        %v503 = vsel %vm481, %v502, %v497
        %v504 = vsel %vm483, %v503, %v494
        %v505 = vsel %vm485, %v504, %v497
        %507 = vrot.lane.b32.xlu0 %v464, 32
        %v508 = vpop.permute.xlu0 %507
        %v510 = vmul.f32 %v459, %v508
        %v511 = vmul.f32 %v505, %v465
        %513 = vrot.lane.b32.xlu0 %v511, 32
        %v514 = vpop.permute.xlu0 %513
        %v516 = vadd.f32 %v510, %v514
        %v517 = vpack.c.bf16 %v516, %v516
        %v519 = vunpack.c.l.b16 %v517
        %v520 = vpack.c.b16 %v519, %v519
        %521 = vrot.lane.b32.xlu0 %v520, 96
        %v522 = vpop.permute.xlu0 %521
        %524 = vst.msk [vmem:[%s372] sm:$0xf] %vm491, %v522
        %v525 = vpack.c.bf16 %v459, %v459
        %v527 = vunpack.c.l.b16 %v525
        %v528 = vpack.c.b16 %v527, %v527
        %529 = vrot.lane.b32.xlu0 %v528, 64
        %v530 = vpop.permute.xlu0 %529
        %532 = vst.msk [vmem:[%s379] sm:$0xf] %vm491, %v530
        %s533 = sand.u32 %s173, 1
        %s534 = scalar_lea.sflag [#allocation4], %s533
        %s535 = sand.u32 %s173, 1
        %s536 = smul.addr %s535, 4
        %s537 = scalar_lea.vmem [#allocation8], %s536
        %s538 = sand.u32 %s29, 1
        %s539 = scalar_lea.sflag [#allocation10], %s538
        %s540 = sand.u32 %s201, 1
        %s541 = smul.addr %s540, 4
        %s542 = scalar_lea.vmem [#allocation9], %s541
        %s543 = sand.u32 %s29, 1
        %s544 = scalar_lea.sflag [#allocation10], %s543
        %s545 = sand.u32 %s229, 1
        %s546 = smul.addr %s545, 4
        %s547 = scalar_lea.vmem [#allocation11], %s546
        // Predicated region
        $region53: #{tpu_custom_call.1} parent=39 // pred_check
          %p548 = pneg %p183
        $region54: #{tpu_custom_call.1} parent=39 // pred_check_branch
          %550 = sbr.rel (%p548) target = $region56
        $region55: #{tpu_custom_call.1} parent=39 // pred_region
          %s552 = ssub.s32 64, 64
          %553 = vsyncadd %s534, %s552
          %s554 = sadd.s32 %s34, %s33
          %s555 = smul.addr %s554, 64
          %s556 = scalar_lea.hbm %s5, %s555
          %s558 = sshll.u32 %s537, 4
          %s559 = int_to_ptr.vmem [resolvable:$true] %s558
          %561 = dma.vmem_to_hbm [thread:$0]  %s559, 64, %s556, %s534
        $region56: #{tpu_custom_call.1} parent=39 // pred_fallthru
          _
        // Predicated region
        $region57: #{tpu_custom_call.1} parent=39 // pred_check
          %p562 = pneg %p211
        $region58: #{tpu_custom_call.1} parent=39 // pred_check_branch
          %564 = sbr.rel (%p562) target = $region60
        $region59: #{tpu_custom_call.1} parent=39 // pred_region
          %s566 = ssub.s32 64, 64
          %567 = vsyncadd %s539, %s566
          %s568 = sadd.s32 %s34, %s33
          %s569 = smul.addr %s568, 64
          %s570 = scalar_lea.hbm %s6, %s569
          %s572 = sshll.u32 %s542, 4
          %s573 = int_to_ptr.vmem [resolvable:$true] %s572
          %575 = dma.vmem_to_hbm [thread:$0]  %s573, 64, %s570, %s539
        $region60: #{tpu_custom_call.1} parent=39 // pred_fallthru
          _
        // Predicated region
        $region61: #{tpu_custom_call.1} parent=39 // pred_check
          %p576 = pneg %p239
        $region62: #{tpu_custom_call.1} parent=39 // pred_check_branch
          %578 = sbr.rel (%p576) target = $region64
        $region63: #{tpu_custom_call.1} parent=39 // pred_region
          %s580 = ssub.s32 64, 64
          %581 = vsyncadd %s544, %s580
          %s582 = sadd.s32 %s34, %s33
          %s583 = smul.addr %s582, 64
          %s584 = scalar_lea.hbm %s7, %s583
          %s586 = sshll.u32 %s547, 4
          %s587 = int_to_ptr.vmem [resolvable:$true] %s586
          %589 = dma.vmem_to_hbm [thread:$0]  %s587, 64, %s584, %s544
        $region64: #{tpu_custom_call.1} parent=39 // pred_fallthru
          _
      $region40: #{tpu_custom_call.1} parent=5 // pred_fallthru
        _
      %p590 = scmp.le.s32.totalorder 2, %s24
      // Predicated region
      $region65: #{tpu_custom_call.1} parent=5 // pred_check
        %p591 = pneg %p590
      $region66: #{tpu_custom_call.1} parent=5 // pred_check_branch
        %593 = sbr.rel (%p591) target = $region68
      $region67: #{tpu_custom_call.1} parent=5 // pred_region
        %s594 = ssub.s32 %s24, 2
        // Predicated region
        $region69: #{tpu_custom_call.1} parent=67 // pred_check
          %p595 = pneg %p189
        $region70: #{tpu_custom_call.1} parent=67 // pred_check_branch
          %597 = sbr.rel (%p595) target = $region72
        $region71: #{tpu_custom_call.1} parent=67 // pred_region
          %s598 = sand.u32 %s174, 1
          %s599 = scalar_lea.sflag [#allocation4], %s598
          %s600 = sand.u32 %s174, 1
          %s601 = smul.addr %s600, 4
          %s602 = scalar_lea.vmem [#allocation8], %s601
          %603 = dma.done %s599, 64
        $region72: #{tpu_custom_call.1} parent=67 // pred_fallthru
          _
        // Predicated region
        $region73: #{tpu_custom_call.1} parent=67 // pred_check
          %p604 = pneg %p217
        $region74: #{tpu_custom_call.1} parent=67 // pred_check_branch
          %606 = sbr.rel (%p604) target = $region76
        $region75: #{tpu_custom_call.1} parent=67 // pred_region
          %s607 = sand.u32 %s30, 1
          %s608 = scalar_lea.sflag [#allocation10], %s607
          %s609 = sand.u32 %s202, 1
          %s610 = smul.addr %s609, 4
          %s611 = scalar_lea.vmem [#allocation9], %s610
          %612 = dma.done %s608, 64
        $region76: #{tpu_custom_call.1} parent=67 // pred_fallthru
          _
        // Predicated region
        $region77: #{tpu_custom_call.1} parent=67 // pred_check
          %p613 = pneg %p245
        $region78: #{tpu_custom_call.1} parent=67 // pred_check_branch
          %615 = sbr.rel (%p613) target = $region80
        $region79: #{tpu_custom_call.1} parent=67 // pred_region
          %s616 = sand.u32 %s30, 1
          %s617 = scalar_lea.sflag [#allocation10], %s616
          %s618 = sand.u32 %s230, 1
          %s619 = smul.addr %s618, 4
          %s620 = scalar_lea.vmem [#allocation11], %s619
          %621 = dma.done %s617, 64
        $region80: #{tpu_custom_call.1} parent=67 // pred_fallthru
          _
      $region68: #{tpu_custom_call.1} parent=5 // pred_fallthru
        _
    $region6: #{tpu_custom_call.1} parent=1 // loop_footer
      %s28 = sadd.s32 1, %s24
    $region7: #{tpu_custom_call.1} parent=1 // loop_footer_branch
      %23 = sbr.rel target = $region3
    $region8: #{tpu_custom_call.1} parent=1 // loop_exit
      _
    %622 = vsyncpa [#allocation3], 1
    %s623 = scalar_lea.sflag [#allocation3], 1
    %624 = vsyncpa %s623, 1
    %625 = vsyncpa [#allocation6], 1
    %626 = vsyncpa [#allocation4], 1
    %s627 = scalar_lea.sflag [#allocation4], 1
    %628 = vsyncpa %s627, 1
    %629 = vsyncpa [#allocation10], 1
    %s630 = scalar_lea.sflag [#allocation10], 1
    %631 = vsyncpa %s630, 1

</llo_original>
